<compile_context>
chip_gen: v6e
topology: v6e:2x2x1
jax: 0.10.0
libtpu: 0.0.40
codegen_flags: <defaults>
</compile_context>

<pallas_src>
import math

import jax
import jax.numpy as jnp
from jax.experimental import pallas as pl
from jax.experimental.pallas import tpu as pltpu


# ----------------------------------------------------------------------------
# Kernel
# ----------------------------------------------------------------------------
def _scalar_embedder_kernel(x_ref, freqs_ref, phase_ref, w1_ref, b1_ref,
                            w2_ref, b2_ref, o_ref):
    """Fused: phase-shifted-cos timestep embedding + Linear + SiLU + Linear."""
    x = x_ref[...]                                        # (B, 1) f32 scalars
    # [cos(t*f), sin(t*f)] == cos(t*[f, f] + [0, -pi/2]) : one EUP pass.
    emb = jnp.cos(x * freqs_ref[...] + phase_ref[...])    # (B, Ep) f32
    # First Linear: bf16 operands, f32 accumulation on the MXU.
    h = jnp.dot(emb.astype(w1_ref.dtype), w1_ref[...],
                preferred_element_type=jnp.float32)
    h = h + b1_ref[...].astype(jnp.float32)               # (B, Dp)
    h = h * jax.nn.sigmoid(h)                             # SiLU in f32
    # Second (zero-initialized) Linear.
    out = jnp.dot(h.astype(w2_ref.dtype), w2_ref[...],
                  preferred_element_type=jnp.float32)
    out = out + b2_ref[...].astype(jnp.float32)
    o_ref[...] = out.astype(o_ref.dtype)


# ----------------------------------------------------------------------------
# Parameter init (module-faithful, f32) and packing for the kernel
# ----------------------------------------------------------------------------
def init_scalar_embedder_params(key, embed_dim, out_dim, max_period=10000.0):
    """Module-faithful parameters (PyTorch-style init), kept in f32."""
    half = embed_dim // 2
    freqs = jnp.exp(
        -math.log(max_period) * jnp.arange(half, dtype=jnp.float32) / half
    )                                                      # (half,)
    k1, k2 = jax.random.split(key)
    bound = 1.0 / math.sqrt(embed_dim)
    w1 = jax.random.uniform(k1, (embed_dim, out_dim), jnp.float32, -bound, bound)
    b1 = jax.random.uniform(k2, (out_dim,), jnp.float32, -bound, bound)
    # zero_module(Linear(out_dim, out_dim)): zero-initialized.
    w2 = jnp.zeros((out_dim, out_dim), jnp.float32)
    b2 = jnp.zeros((out_dim,), jnp.float32)
    return dict(freqs=freqs, w1=w1, b1=b1, w2=w2, b2=b2)


def _round_up(n, m):
    return ((n + m - 1) // m) * m


def pack_scalar_embedder_params(raw, weight_dtype=jnp.bfloat16):
    """Pad to lane-dense (multiple of 128) layout, fuse cos/sin, cast weights to bf16."""
    freqs = raw["freqs"]
    w1, b1, w2, b2 = raw["w1"], raw["b1"], raw["w2"], raw["b2"]
    half = freqs.shape[0]
    embed_dim, D = w1.shape

    # PyTorch timestep_embedding zero-pads odd embed_dim; that padded feature is
    # exactly zero, so its weight row never contributes -> drop it.
    w1 = w1[: 2 * half]

    Ep = max(128, _round_up(2 * half, 128))
    Dp = max(128, _round_up(D, 128))

    freqs_full = (jnp.zeros((1, Ep), jnp.float32)
                  .at[0, :half].set(freqs)
                  .at[0, half:2 * half].set(freqs))
    phase = jnp.zeros((1, Ep), jnp.float32).at[0, half:2 * half].set(-math.pi / 2.0)

    w1_p = jnp.zeros((Ep, Dp), weight_dtype).at[:2 * half, :D].set(w1.astype(weight_dtype))
    b1_p = jnp.zeros((1, Dp), weight_dtype).at[0, :D].set(b1.astype(weight_dtype))
    w2_p = jnp.zeros((Dp, Dp), weight_dtype).at[:D, :D].set(w2.astype(weight_dtype))
    b2_p = jnp.zeros((1, Dp), weight_dtype).at[0, :D].set(b2.astype(weight_dtype))

    return dict(freqs=freqs_full, phase=phase, w1=w1_p, b1=b1_p, w2=w2_p, b2=b2_p)


# ----------------------------------------------------------------------------
# Wrapper
# ----------------------------------------------------------------------------
def scalar_embedder(x, params, out_dim, out_dtype=jnp.float32):
    """x: (B,) scalar timesteps -> (B, 1, out_dim)."""
    B = x.shape[0]
    Ep = params["w1"].shape[0]
    Dp = params["w2"].shape[1]

    operands = (
        x.reshape(B, 1).astype(jnp.float32),
        params["freqs"], params["phase"],
        params["w1"], params["b1"], params["w2"], params["b2"],
    )

    in_bytes = sum(int(a.size) * a.dtype.itemsize for a in operands)
    out_bytes = B * Dp * jnp.dtype(out_dtype).itemsize
    cost = pl.CostEstimate(
        flops=2 * B * (Ep * Dp + Dp * Dp),
        transcendentals=B * (Ep + Dp),          # one cos pass + sigmoid
        bytes_accessed=in_bytes + out_bytes,
    )
    # Keep a 32 MiB floor (default scoped VMEM) and raise it when the (bf16)
    # weights get big; cap below physical.  For out_dim >= ~4096 on v7x the w2
    # matmul should instead be tiled over its N dimension with a grid.
    vmem_limit = min(100 * 2**20, max(32 * 2**20, 2 * (in_bytes + out_bytes) + (4 << 20)))

    out = pl.pallas_call(
        _scalar_embedder_kernel,
        out_shape=jax.ShapeDtypeStruct((B, Dp), out_dtype),
        in_specs=[pl.BlockSpec(memory_space=pltpu.MemorySpace.VMEM)] * 7,
        out_specs=pl.BlockSpec(memory_space=pltpu.MemorySpace.VMEM),
        cost_estimate=cost,
        compiler_params=pltpu.CompilerParams(vmem_limit_bytes=vmem_limit),
    )(*operands)

    return out[:, :out_dim].reshape(B, 1, out_dim)   # 'b d -> b 1 d'


# ----------------------------------------------------------------------------
# Pure-JAX references for correctness checks
# ----------------------------------------------------------------------------
def _reference_module(x, raw):
    """Module-faithful reference: concat([cos, sin]) + f32 Linear/SiLU/Linear."""
    B = x.shape[0]
    half = raw["freqs"].shape[0]
    args = x.reshape(B, 1).astype(jnp.float32) * raw["freqs"].reshape(1, half)
    emb = jnp.concatenate([jnp.cos(args), jnp.sin(args)], axis=-1)
    if raw["w1"].shape[0] > emb.shape[-1]:   # odd embed_dim zero-pad
        emb = jnp.pad(emb, ((0, 0), (0, raw["w1"].shape[0] - emb.shape[-1])))
    h = emb @ raw["w1"] + raw["b1"]
    h = h * jax.nn.sigmoid(h)
    out = h @ raw["w2"] + raw["b2"]
    return out.reshape(B, 1, -1)


def _reference_kernel_math(x, packed, out_dim):
    """Mirrors the kernel math exactly (bf16 operands, f32 accumulation)."""
    B = x.shape[0]
    emb = jnp.cos(x.reshape(B, 1).astype(jnp.float32) * packed["freqs"] + packed["phase"])
    h = jnp.dot(emb.astype(packed["w1"].dtype), packed["w1"],
                preferred_element_type=jnp.float32) + packed["b1"].astype(jnp.float32)
    h = h * jax.nn.sigmoid(h)
    out = jnp.dot(h.astype(packed["w2"].dtype), packed["w2"],
                  preferred_element_type=jnp.float32) + packed["b2"].astype(jnp.float32)
    return out[:, :out_dim].reshape(B, 1, out_dim)


# ----------------------------------------------------------------------------
# Demo / self-test
# ----------------------------------------------------------------------------
if __name__ == "__main__":
    embed_dim = 32
    out_dim = 32
    batch = 4

    key = jax.random.PRNGKey(0)
    k_param, k_x, k_w2, k_b2 = jax.random.split(key, 4)

    raw = init_scalar_embedder_params(k_param, embed_dim, out_dim)
    packed = pack_scalar_embedder_params(raw)

    # Scalar timesteps in [0, 1000), one per batch element.
    x = jax.random.uniform(k_x, (batch,), jnp.float32, 0.0, 1000.0)

    # 1) Module-faithful forward: zero-initialized last Linear -> output is exactly 0.
    out = jax.block_until_ready(scalar_embedder(x, packed, out_dim))
    assert out.shape == (batch, 1, out_dim)
    assert float(jnp.max(jnp.abs(out))) == 0.0, "zero-init second Linear must give zeros"

    # 2) Math sanity check: non-zero second Linear (not the module's init; just
    #    exercises every op in the kernel) vs a reference that mirrors the
    #    kernel's bf16-operand math -> tight tolerance.
    bound2 = 1.0 / math.sqrt(out_dim)
    raw_nz = dict(raw)
    raw_nz["w2"] = jax.random.uniform(k_w2, (out_dim, out_dim), jnp.float32, -bound2, bound2)
    raw_nz["b2"] = jax.random.uniform(k_b2, (out_dim,), jnp.float32, -bound2, bound2)
    packed_nz = pack_scalar_embedder_params(raw_nz)

    out_nz = jax.block_until_ready(scalar_embedder(x, packed_nz, out_dim))
    ref_mirror = _reference_kernel_math(x, packed_nz, out_dim)
    assert jnp.allclose(out_nz, ref_mirror, atol=2e-3, rtol=2e-3), \
        "mismatch vs bf16-mirror reference"

    # 3) Against the full-f32 module-faithful reference the only difference is
    #    bf16 weight/operand quantization -> loose tolerance.
    ref_module = _reference_module(x, raw_nz)
    assert jnp.allclose(out_nz, ref_module, atol=1e-1, rtol=1e-1), \
        "mismatch vs f32 module reference"

    print("KERNEL_OK")
</pallas_src>

<mosaic_0001>
module attributes {stable_mosaic.version = 11 : i64} {
  func.func @_scalar_embedder_kernel(%arg0: memref<4x1xf32, #tpu.memory_space<vmem>>, %arg1: memref<1x128xf32, #tpu.memory_space<vmem>>, %arg2: memref<1x128xf32, #tpu.memory_space<vmem>>, %arg3: memref<128x128xbf16, #tpu.memory_space<vmem>>, %arg4: memref<1x128xbf16, #tpu.memory_space<vmem>>, %arg5: memref<128x128xbf16, #tpu.memory_space<vmem>>, %arg6: memref<1x128xbf16, #tpu.memory_space<vmem>>, %arg7: memref<4x128xf32, #tpu.memory_space<vmem>>) attributes {dimension_semantics = [], scalar_prefetch = 0 : i64, scratch_operands = 0 : i64, tpu.core_type = #tpu.core_type<tc>} {
    %c0 = arith.constant 0 : index
    %c0_0 = arith.constant 0 : index
    %0 = vector.load %arg0[%c0, %c0_0] : memref<4x1xf32, #tpu.memory_space<vmem>>, vector<4x1xf32>
    %c0_1 = arith.constant 0 : index
    %c0_2 = arith.constant 0 : index
    %1 = vector.load %arg1[%c0_1, %c0_2] : memref<1x128xf32, #tpu.memory_space<vmem>>, vector<1x128xf32>
    %2 = vector.broadcast %0 : vector<4x1xf32> to vector<4x128xf32>
    %3 = vector.broadcast %1 : vector<1x128xf32> to vector<4x128xf32>
    %4 = arith.mulf %2, %3 : vector<4x128xf32>
    %c0_3 = arith.constant 0 : index
    %c0_4 = arith.constant 0 : index
    %5 = vector.load %arg2[%c0_3, %c0_4] : memref<1x128xf32, #tpu.memory_space<vmem>>, vector<1x128xf32>
    %6 = vector.broadcast %5 : vector<1x128xf32> to vector<4x128xf32>
    %7 = arith.addf %4, %6 : vector<4x128xf32>
    %8 = math.cos %7 : vector<4x128xf32>
    %9 = arith.truncf %8 : vector<4x128xf32> to vector<4x128xbf16>
    %c0_5 = arith.constant 0 : index
    %c0_6 = arith.constant 0 : index
    %10 = vector.load %arg3[%c0_5, %c0_6] : memref<128x128xbf16, #tpu.memory_space<vmem>>, vector<128x128xbf16>
    %cst = arith.constant dense<0.000000e+00> : vector<4x128xf32>
    %11 = tpu.matmul %9, %10, %cst {dimension_numbers = #tpu.dot_dimension_numbers<[1], [0], [0], [1], [0, 0, 1, 1], [], []>} : vector<4x128xbf16>, vector<128x128xbf16>, vector<4x128xf32> -> vector<4x128xf32>
    %c0_7 = arith.constant 0 : index
    %c0_8 = arith.constant 0 : index
    %12 = vector.load %arg4[%c0_7, %c0_8] : memref<1x128xbf16, #tpu.memory_space<vmem>>, vector<1x128xbf16>
    %13 = arith.extf %12 : vector<1x128xbf16> to vector<1x128xf32>
    %14 = vector.broadcast %13 : vector<1x128xf32> to vector<4x128xf32>
    %15 = arith.addf %11, %14 : vector<4x128xf32>
    %16 = arith.negf %15 : vector<4x128xf32>
    %17 = math.exp %16 : vector<4x128xf32>
    %cst_9 = arith.constant 1.000000e+00 : f32
    %18 = vector.broadcast %cst_9 : f32 to vector<4x128xf32>
    %19 = arith.addf %18, %17 : vector<4x128xf32>
    %20 = arith.divf %18, %19 : vector<4x128xf32>
    %21 = arith.mulf %15, %20 : vector<4x128xf32>
    %22 = arith.truncf %21 : vector<4x128xf32> to vector<4x128xbf16>
    %c0_10 = arith.constant 0 : index
    %c0_11 = arith.constant 0 : index
    %23 = vector.load %arg5[%c0_10, %c0_11] : memref<128x128xbf16, #tpu.memory_space<vmem>>, vector<128x128xbf16>
    %cst_12 = arith.constant dense<0.000000e+00> : vector<4x128xf32>
    %24 = tpu.matmul %22, %23, %cst_12 {dimension_numbers = #tpu.dot_dimension_numbers<[1], [0], [0], [1], [0, 0, 1, 1], [], []>} : vector<4x128xbf16>, vector<128x128xbf16>, vector<4x128xf32> -> vector<4x128xf32>
    %c0_13 = arith.constant 0 : index
    %c0_14 = arith.constant 0 : index
    %25 = vector.load %arg6[%c0_13, %c0_14] : memref<1x128xbf16, #tpu.memory_space<vmem>>, vector<1x128xbf16>
    %26 = arith.extf %25 : vector<1x128xbf16> to vector<1x128xf32>
    %27 = vector.broadcast %26 : vector<1x128xf32> to vector<4x128xf32>
    %28 = arith.addf %24, %27 : vector<4x128xf32>
    %c0_15 = arith.constant 0 : index
    %c0_16 = arith.constant 0 : index
    %29 = vector.load %arg7[%c0_15, %c0_16] : memref<4x128xf32, #tpu.memory_space<vmem>>, vector<4x128xf32>
    tpu.vector_store %arg7[%c0_15, %c0_16], %28 {strides = array<i32>} : memref<4x128xf32, #tpu.memory_space<vmem>>, vector<4x128xf32>,
    return
  }
}

</mosaic_0001>

<llo_original>
// kernel: tpu_custom_call.1
$region0: #{tpu_custom_call.1}
  #allocation0 [shape = 'u32[]', space=smem, size = 0x4, offset = 0x4, fixed_abs, tag = 'smem constant byte address 0x4 - core index']
  #allocation1 [shape = 'u32[144,128]{1,0:T(1,128)}', space=vmem, size = 0x12000, scoped, tag = 'internal scratch']
  %s0 = inlined_call_operand.vmem [shape: f32[4,1], index: 0, kind: input, shape index: {}]
  %s1 = inlined_call_operand.vmem [shape: f32[1,128], index: 1, kind: input, shape index: {}]
  %s2 = inlined_call_operand.vmem [shape: f32[1,128], index: 2, kind: input, shape index: {}]
  %s3 = inlined_call_operand.hbm [shape: bf16[128,128], index: 3, kind: input, shape index: {}]
  %s4 = inlined_call_operand.vmem [shape: bf16[1,128], index: 4, kind: input, shape index: {}]
  %s5 = inlined_call_operand.hbm [shape: bf16[128,128], index: 5, kind: input, shape index: {}]
  %s6 = inlined_call_operand.vmem [shape: bf16[1,128], index: 6, kind: input, shape index: {}]
  %s7 = inlined_call_operand.hbm [shape: f32[4,128], index: 7, kind: output, shape index: {}]
  %s8 = sld [smem:[#allocation0]]
  $region46: #{tpu_custom_call.1} parent=0
    _
  %s10 = ssub.s32 1, %s8
  %s11 = scalar_select 0, %s10, %s8
  $region1: #{tpu_custom_call.1} parent=0
    #allocation2 [shape = 'u8[32768]{0}', space=vmem, size = 0x8000, scoped, tag = 'input window, operand 3, single buffered']
    #allocation3 [shape = 's32[1]{0}', space=sflag, size = 0x4, scoped, tag = 'scoped memory for tpu_custom_call.1']
    #allocation4 [shape = 's32[1]{0}', space=sflag, size = 0x4, scoped, tag = 'scoped memory for tpu_custom_call.1']
    #allocation5 [shape = 'u8[32768]{0}', space=vmem, size = 0x8000, scoped, tag = 'input window, operand 5, single buffered']
    #allocation6 [shape = 's32[1]{0}', space=sflag, size = 0x4, scoped, tag = 'scoped memory for tpu_custom_call.1']
    #allocation7 [shape = 'u8[2048]{0}', space=vmem, size = 0x800, scoped, tag = 'output window, operand 0, single buffered']
    %12 = vsyncpa [#allocation3], 0
    %13 = vsyncpa [#allocation6], 0
    %14 = vsyncpa [#allocation4], 0
    // Predicated region
    $region2: #{tpu_custom_call.1} parent=1 // pred_check
      _
    $region3: #{tpu_custom_call.1} parent=1 // pred_check_branch
      %16 = sbr.rel (0) target = $region5
    $region4: #{tpu_custom_call.1} parent=1 // pred_region
      _
    $region5: #{tpu_custom_call.1} parent=1 // pred_fallthru
      _
    // Predicated region
    $region6: #{tpu_custom_call.1} parent=1 // pred_check
      _
    $region7: #{tpu_custom_call.1} parent=1 // pred_check_branch
      %18 = sbr.rel (0) target = $region9
    $region8: #{tpu_custom_call.1} parent=1 // pred_region
      _
    $region9: #{tpu_custom_call.1} parent=1 // pred_fallthru
      _
    // Predicated region
    $region10: #{tpu_custom_call.1} parent=1 // pred_check
      _
    $region11: #{tpu_custom_call.1} parent=1 // pred_check_branch
      %20 = sbr.rel (0) target = $region13
    $region12: #{tpu_custom_call.1} parent=1 // pred_region
      _
    $region13: #{tpu_custom_call.1} parent=1 // pred_fallthru
      _
    // Predicated region
    $region14: #{tpu_custom_call.1} parent=1 // pred_check
      _
    $region15: #{tpu_custom_call.1} parent=1 // pred_check_branch
      %22 = sbr.rel (0) target = $region17
    $region16: #{tpu_custom_call.1} parent=1 // pred_region
      %s24 = ssub.s32 1024, 1024
      %25 = vsyncadd [#allocation3], %s24
      %s26 = sshll.u32 [#allocation2], 4
      %s27 = int_to_ptr.vmem [resolvable:$true] %s26
      %32 = dma.hbm_to_vmem [thread:$0]  %s3, 1024, %s27, [#allocation3], 64, 64, 4
    $region17: #{tpu_custom_call.1} parent=1 // pred_fallthru
      _
    // Predicated region
    $region18: #{tpu_custom_call.1} parent=1 // pred_check
      _
    $region19: #{tpu_custom_call.1} parent=1 // pred_check_branch
      %34 = sbr.rel (0) target = $region21
    $region20: #{tpu_custom_call.1} parent=1 // pred_region
      _
    $region21: #{tpu_custom_call.1} parent=1 // pred_fallthru
      _
    // Predicated region
    $region22: #{tpu_custom_call.1} parent=1 // pred_check
      _
    $region23: #{tpu_custom_call.1} parent=1 // pred_check_branch
      %36 = sbr.rel (0) target = $region25
    $region24: #{tpu_custom_call.1} parent=1 // pred_region
      %s38 = ssub.s32 1024, 1024
      %39 = vsyncadd [#allocation6], %s38
      %s40 = sshll.u32 [#allocation5], 4
      %s41 = int_to_ptr.vmem [resolvable:$true] %s40
      %46 = dma.hbm_to_vmem [thread:$0]  %s5, 1024, %s41, [#allocation6], 64, 64, 4
    $region25: #{tpu_custom_call.1} parent=1 // pred_fallthru
      _
    // Predicated region
    $region26: #{tpu_custom_call.1} parent=1 // pred_check
      _
    $region27: #{tpu_custom_call.1} parent=1 // pred_check_branch
      %48 = sbr.rel (0) target = $region29
    $region28: #{tpu_custom_call.1} parent=1 // pred_region
      _
    $region29: #{tpu_custom_call.1} parent=1 // pred_fallthru
      _
    // Predicated region
    $region30: #{tpu_custom_call.1} parent=1 // pred_check
      _
    $region31: #{tpu_custom_call.1} parent=1 // pred_check_branch
      %50 = sbr.rel (0) target = $region33
    $region32: #{tpu_custom_call.1} parent=1 // pred_region
      %51 = dma.done [#allocation3], 1024
    $region33: #{tpu_custom_call.1} parent=1 // pred_fallthru
      _
    // Predicated region
    $region34: #{tpu_custom_call.1} parent=1 // pred_check
      _
    $region35: #{tpu_custom_call.1} parent=1 // pred_check_branch
      %53 = sbr.rel (0) target = $region37
    $region36: #{tpu_custom_call.1} parent=1 // pred_region
      %54 = dma.done [#allocation6], 1024
    $region37: #{tpu_custom_call.1} parent=1 // pred_fallthru
      _
    %v56 = vld [vmem:[%s0] sm:$0xf]
    %v57 = vld [vmem:[%s1] sm:$0x1]
    %59 = vset.pattern.permute.xlu0 0
    %60 = vperm.xlu0 %59, %v56
    %v61 = vpop.permute.xlu0 %60
    %v64 = vlaneseq
    %v65 = vshrl.u32 %v64, 7
    %v66 = vsub.s32 0, %v65
    %v67 = vrot.slane %v57, %v66
    %v69 = vmul.f32 %v61, %v67
    %v70 = vld [vmem:[%s2] sm:$0x1]
    %v72 = vlaneseq
    %v73 = vshrl.u32 %v72, 7
    %v74 = vsub.s32 0, %v73
    %v75 = vrot.slane %v70, %v74
    %v77 = vadd.f32 %v69, %v75
    %v78 = vand.u32 2147483647, %v77
    %vm79 = vcmp.le.f32.partialorder %v78, 0.7853982
    %vm80 = vcmp.lt.s32.totalorder %v77, 0
    %v81 = vand.u32 %v77, 2139095040
    %v82 = vshrl.u32 %v81, 23
    %v83 = vsub.s32 %v82, 127
    %v84 = vand.u32 2147483647, %v77
    %v85 = vand.u32 %v84, 8388607
    %v86 = vor.u32 %v85, 8388608
    %v87 = vsub.s32 0, %v86
    %v88 = vadd.s32 %v83, 1
    %vm89 = vcmp.gt.s32.totalorder %v88, 0
    %v90 = vsel %vm89, %v88, 0
    %v91 = vshrl.u32 %v90, 5
    %v92 = vand.u32 %v90, 31
    %v93 = vsub.s32 32, %v92
    %v94 = vshrl.u32 683565275, %v93
    %v95 = vshll.u32 683565275, %v92
    %v96 = vshrl.u32 2475754826, %v93
    %v97 = vor.u32 %v95, %v96
    %v98 = vshll.u32 2475754826, %v92
    %v99 = vshrl.u32 2131351028, %v93
    %v100 = vor.u32 %v98, %v99
    %v101 = vshll.u32 2131351028, %v92
    %v102 = vshrl.u32 2102212464, %v93
    %v103 = vor.u32 %v101, %v102
    %v104 = vshll.u32 2102212464, %v92
    %v105 = vshrl.u32 920167782, %v93
    %v106 = vor.u32 %v104, %v105
    %v107 = vshll.u32 920167782, %v92
    %v108 = vshrl.u32 1326507024, %v93
    %v109 = vor.u32 %v107, %v108
    %vm110 = vcmp.lt.s32.totalorder %v91, 1
    %vm111 = vcmp.lt.s32.totalorder %v91, 2
    %vm112 = vcmp.lt.s32.totalorder %v91, 3
    %vm113 = vcmp.lt.s32.totalorder %v91, 4
    %v114 = vsel %vm110, %v94, %v97
    %v115 = vsel %vm113, %v103, 2102212464
    %v116 = vsel %vm112, %v100, %v115
    %v117 = vsel %vm111, %v114, %v116
    %v118 = vsel %vm110, %v97, %v100
    %v119 = vsel %vm113, %v106, 920167782
    %v120 = vsel %vm112, %v103, %v119
    %v121 = vsel %vm111, %v118, %v120
    %v122 = vsel %vm110, %v100, %v103
    %v123 = vsel %vm113, %v109, 1326507024
    %v124 = vsel %vm112, %v106, %v123
    %v125 = vsel %vm111, %v122, %v124
    %v126 = vshll.u32 %v86, 8
    %v127 = vmul.u32.u64.compose %v126, %v125
    %v128 = vextract.low.u32 %v127
    %v129 = vextract.high.u32 %v127
    %v130 = vmul.u32.u64.compose %v126, %v121
    %v131 = vextract.low.u32 %v130
    %v132 = vextract.high.u32 %v130
    %v133 = vmul.u32 %v126, %v117
    %v134 = vadd.s32 %v129, %v131
    %vm135 = vc.u32 %v129, %v131
    %v136 = vadd.s32 %v132, 1
    %v137 = vsel %vm135, %v136, %v132
    %v138 = vadd.s32 %v133, %v137
    %v139 = vadd.s32 %v138, 536870912
    %v140 = vshrl.u32 %v139, 30
    %v141 = vshll.u32 %v140, 30
    %v142 = vsub.s32 %v138, %v141
    %vm143 = vcmp.lt.s32.totalorder %v142, 0
    %v144 = vsub.s32 0, %v142
    %v145 = vsel %vm143, %v144, %v142
    %v146 = vclz %v145
    %v147 = vsub.s32 %v146, 2
    %vm148 = vcmp.gt.s32.totalorder 0, %v147
    %v149 = vsel %vm148, 0, %v147
    %v150 = vsub.s32 32, %v149
    %v151 = vshll.u32 %v142, %v149
    %v152 = vshrl.u32 %v134, %v150
    %v153 = vor.u32 %v151, %v152
    %v154 = vsub.s32 4294967266, %v149
    %v155 = vadd.s32 %v154, 127
    %v156 = vshll.u32 %v155, 23
    %v157 = vor.u32 4788187, %v156
    %v158 = vand.u32 2147483647, %v157
    %v160 = vcvt.s32.f32 %v153
    %v161 = vmul.f32 %v160, %v158
    %v162 = vxor.u32 %v161, 2147483648
    %v163 = vsel %vm80, %v162, %v161
    %v164 = vsub.s32 4, %v140
    %v165 = vsel %vm80, %v164, %v140
    %v166 = vsel %vm79, %v77, %v163
    %v167 = vsel %vm79, 0, %v165
    %v168 = vcosq.f32.pop %v166
    %v169 = vsinq.f32.pop %v166
    %vm170 = vweird.f32 %v77
    %v171 = vand.u32 %v167, 3
    %vm172 = vcmp.lt.s32.totalorder %v171, 2
    %vm173 = vcmp.eq.s32.totalorder %v171, 0
    %v174 = vxor.u32 %v169, 2147483648
    %v175 = vsel %vm173, %v168, %v174
    %vm176 = vcmp.eq.s32.totalorder %v171, 2
    %v177 = vxor.u32 %v168, 2147483648
    %v178 = vsel %vm176, %v177, %v169
    %v179 = vsel %vm172, %v175, %v178
    %v180 = vsel %vm170, nan, %v179
    %v181 = vpack.c.bf16 %v180, %v180
    %v182 = vld [vmem:[#allocation2] sm:$0xf]
    %v183 = vld [vmem:[#allocation2 + $0x4] sm:$0xf]
    %v184 = vld [vmem:[#allocation2 + $0x8] sm:$0xf]
    %v185 = vld [vmem:[#allocation2 + $0xc] sm:$0xf]
    %v186 = vld [vmem:[#allocation2 + $0x10] sm:$0xf]
    %v187 = vld [vmem:[#allocation2 + $0x14] sm:$0xf]
    %v188 = vld [vmem:[#allocation2 + $0x18] sm:$0xf]
    %v189 = vld [vmem:[#allocation2 + $0x1c] sm:$0xf]
    %v190 = vld [vmem:[#allocation2 + $0x20] sm:$0xf]
    %v191 = vld [vmem:[#allocation2 + $0x24] sm:$0xf]
    %v192 = vld [vmem:[#allocation2 + $0x28] sm:$0xf]
    %v193 = vld [vmem:[#allocation2 + $0x2c] sm:$0xf]
    %v194 = vld [vmem:[#allocation2 + $0x30] sm:$0xf]
    %v195 = vld [vmem:[#allocation2 + $0x34] sm:$0xf]
    %v196 = vld [vmem:[#allocation2 + $0x38] sm:$0xf]
    %v197 = vld [vmem:[#allocation2 + $0x3c] sm:$0xf]
    %v198 = vld [vmem:[%s4] sm:$0x1]
    %v199 = vunpack.c.l.bf16 %v198
    %v200 = vlaneseq
    %v201 = vshrl.u32 %v200, 7
    %v202 = vsub.s32 0, %v201
    %v203 = vrot.slane %v199, %v202
    %v220 = vunpack.c.l.b16 %v182
    %v221 = vunpack.c.l.b16 %v183
    %v222 = vunpack.c.l.b16 %v184
    %v223 = vunpack.c.l.b16 %v185
    %v224 = vunpack.c.l.b16 %v186
    %v225 = vunpack.c.l.b16 %v187
    %v226 = vunpack.c.l.b16 %v188
    %v227 = vunpack.c.l.b16 %v189
    %v228 = vunpack.c.l.b16 %v190
    %v229 = vunpack.c.l.b16 %v191
    %v230 = vunpack.c.l.b16 %v192
    %v231 = vunpack.c.l.b16 %v193
    %v232 = vunpack.c.l.b16 %v194
    %v233 = vunpack.c.l.b16 %v195
    %v234 = vunpack.c.l.b16 %v196
    %v235 = vunpack.c.l.b16 %v197
    %v236 = vpack.c.b16 %v221, %v220
    %v237 = vpack.c.b16 %v223, %v222
    %v238 = vpack.c.b16 %v225, %v224
    %v239 = vpack.c.b16 %v227, %v226
    %v240 = vpack.c.b16 %v229, %v228
    %v241 = vpack.c.b16 %v231, %v230
    %v242 = vpack.c.b16 %v233, %v232
    %v243 = vpack.c.b16 %v235, %v234
    %252 = vmatprep.subr.bf16.mxu0 0
    %253 = vmatpush1.bf16.msra.mxu0 %v243
    %254 = vmatprep.subr.bf16.mxu0 0
    %255 = vmatpush1.bf16.msra.mxu0 %v242
    %256 = vmatprep.subr.bf16.mxu0 0
    %257 = vmatpush1.bf16.msra.mxu0 %v241
    %258 = vmatprep.subr.bf16.mxu0 0
    %259 = vmatpush1.bf16.msra.mxu0 %v240
    %260 = vmatprep.subr.bf16.mxu0 0
    %261 = vmatpush1.bf16.msra.mxu0 %v239
    %262 = vmatprep.subr.bf16.mxu0 0
    %263 = vmatpush1.bf16.msra.mxu0 %v238
    %264 = vmatprep.subr.bf16.mxu0 0
    %265 = vmatpush1.bf16.msra.mxu0 %v237
    %266 = vmatprep.subr.bf16.mxu0 0
    %267 = vmatpush1.bf16.msra.mxu0 %v236
    %268 = vmatprep.subr.bf16.mxu0 0
    %269 = vmatpush2.bf16.msra.mxu0 0
    %270 = vmatprep.subr.bf16.mxu0 0
    %271 = vmatpush2.bf16.msra.mxu0 0
    %272 = vmatprep.subr.bf16.mxu0 0
    %273 = vmatpush2.bf16.msra.mxu0 0
    %274 = vmatprep.subr.bf16.mxu0 0
    %275 = vmatpush2.bf16.msra.mxu0 0
    %276 = vmatprep.subr.bf16.mxu0 0
    %277 = vmatpush2.bf16.msra.mxu0 0
    %278 = vmatprep.subr.bf16.mxu0 0
    %279 = vmatpush2.bf16.msra.mxu0 0
    %280 = vmatprep.subr.bf16.mxu0 0
    %281 = vmatpush2.bf16.msra.mxu0 0
    %282 = vmatprep.subr.bf16.mxu0 0
    %283 = vmatpush2.bf16.msra.mxu0 0
    %284 = vmatprep.mubr.bf16.mxu0 0
    %285 = vmatmul.mubr.bf16.gmra.mxu0 %v181
    %v286 = vpop.f32.mrf.mxu0
    %v287 = vadd.f32 %v203, %v286
    %v288 = vpop.f32.mrf.mxu0
    %v289 = vpop.f32.mrf.mxu0
    %v290 = vpop.f32.mrf.mxu0
    %291 = vdwg.mxu0
    %v292 = vxor.u32 %v287, 2147483648
    %v293 = vmul.f32 %v292, 1.442695
    %v294 = vpow.pop %v293
    %v295 = vadd.f32 %v294, 1.0
    %v296 = vrcp.pop %v295
    %v297 = vmul.f32 1.0, %v296
    %v298 = vmul.f32 %v287, %v297
    %v299 = vpack.c.bf16 %v298, %v298
    %v300 = vld [vmem:[#allocation5] sm:$0xf]
    %v301 = vld [vmem:[#allocation5 + $0x4] sm:$0xf]
    %v302 = vld [vmem:[#allocation5 + $0x8] sm:$0xf]
    %v303 = vld [vmem:[#allocation5 + $0xc] sm:$0xf]
    %v304 = vld [vmem:[#allocation5 + $0x10] sm:$0xf]
    %v305 = vld [vmem:[#allocation5 + $0x14] sm:$0xf]
    %v306 = vld [vmem:[#allocation5 + $0x18] sm:$0xf]
    %v307 = vld [vmem:[#allocation5 + $0x1c] sm:$0xf]
    %v308 = vld [vmem:[#allocation5 + $0x20] sm:$0xf]
    %v309 = vld [vmem:[#allocation5 + $0x24] sm:$0xf]
    %v310 = vld [vmem:[#allocation5 + $0x28] sm:$0xf]
    %v311 = vld [vmem:[#allocation5 + $0x2c] sm:$0xf]
    %v312 = vld [vmem:[#allocation5 + $0x30] sm:$0xf]
    %v313 = vld [vmem:[#allocation5 + $0x34] sm:$0xf]
    %v314 = vld [vmem:[#allocation5 + $0x38] sm:$0xf]
    %v315 = vld [vmem:[#allocation5 + $0x3c] sm:$0xf]
    %v316 = vld [vmem:[%s6] sm:$0x1]
    %v317 = vunpack.c.l.bf16 %v316
    %v318 = vlaneseq
    %v319 = vshrl.u32 %v318, 7
    %v320 = vsub.s32 0, %v319
    %v321 = vrot.slane %v317, %v320
    %v338 = vunpack.c.l.b16 %v300
    %v339 = vunpack.c.l.b16 %v301
    %v340 = vunpack.c.l.b16 %v302
    %v341 = vunpack.c.l.b16 %v303
    %v342 = vunpack.c.l.b16 %v304
    %v343 = vunpack.c.l.b16 %v305
    %v344 = vunpack.c.l.b16 %v306
    %v345 = vunpack.c.l.b16 %v307
    %v346 = vunpack.c.l.b16 %v308
    %v347 = vunpack.c.l.b16 %v309
    %v348 = vunpack.c.l.b16 %v310
    %v349 = vunpack.c.l.b16 %v311
    %v350 = vunpack.c.l.b16 %v312
    %v351 = vunpack.c.l.b16 %v313
    %v352 = vunpack.c.l.b16 %v314
    %v353 = vunpack.c.l.b16 %v315
    %v354 = vpack.c.b16 %v339, %v338
    %v355 = vpack.c.b16 %v341, %v340
    %v356 = vpack.c.b16 %v343, %v342
    %v357 = vpack.c.b16 %v345, %v344
    %v358 = vpack.c.b16 %v347, %v346
    %v359 = vpack.c.b16 %v349, %v348
    %v360 = vpack.c.b16 %v351, %v350
    %v361 = vpack.c.b16 %v353, %v352
    %370 = vmatprep.subr.bf16.mxu0 0
    %371 = vmatpush1.bf16.msra.mxu0 %v361
    %372 = vmatprep.subr.bf16.mxu0 0
    %373 = vmatpush1.bf16.msra.mxu0 %v360
    %374 = vmatprep.subr.bf16.mxu0 0
    %375 = vmatpush1.bf16.msra.mxu0 %v359
    %376 = vmatprep.subr.bf16.mxu0 0
    %377 = vmatpush1.bf16.msra.mxu0 %v358
    %378 = vmatprep.subr.bf16.mxu0 0
    %379 = vmatpush1.bf16.msra.mxu0 %v357
    %380 = vmatprep.subr.bf16.mxu0 0
    %381 = vmatpush1.bf16.msra.mxu0 %v356
    %382 = vmatprep.subr.bf16.mxu0 0
    %383 = vmatpush1.bf16.msra.mxu0 %v355
    %384 = vmatprep.subr.bf16.mxu0 0
    %385 = vmatpush1.bf16.msra.mxu0 %v354
    %386 = vmatprep.subr.bf16.mxu0 0
    %387 = vmatpush2.bf16.msra.mxu0 0
    %388 = vmatprep.subr.bf16.mxu0 0
    %389 = vmatpush2.bf16.msra.mxu0 0
    %390 = vmatprep.subr.bf16.mxu0 0
    %391 = vmatpush2.bf16.msra.mxu0 0
    %392 = vmatprep.subr.bf16.mxu0 0
    %393 = vmatpush2.bf16.msra.mxu0 0
    %394 = vmatprep.subr.bf16.mxu0 0
    %395 = vmatpush2.bf16.msra.mxu0 0
    %396 = vmatprep.subr.bf16.mxu0 0
    %397 = vmatpush2.bf16.msra.mxu0 0
    %398 = vmatprep.subr.bf16.mxu0 0
    %399 = vmatpush2.bf16.msra.mxu0 0
    %400 = vmatprep.subr.bf16.mxu0 0
    %401 = vmatpush2.bf16.msra.mxu0 0
    %402 = vmatprep.mubr.bf16.mxu0 0
    %403 = vmatmul.mubr.bf16.gmra.mxu0 %v299
    %v404 = vpop.f32.mrf.mxu0
    %v405 = vadd.f32 %v321, %v404
    %v406 = vpop.f32.mrf.mxu0
    %v407 = vpop.f32.mrf.mxu0
    %v408 = vpop.f32.mrf.mxu0
    %409 = vdwg.mxu0
    %410 = vst [vmem:[#allocation7] sm:$0xf] %v405
    // Predicated region
    $region38: #{tpu_custom_call.1} parent=1 // pred_check
      _
    $region39: #{tpu_custom_call.1} parent=1 // pred_check_branch
      %412 = sbr.rel (0) target = $region41
    $region40: #{tpu_custom_call.1} parent=1 // pred_region
      %s414 = ssub.s32 64, 64
      %415 = vsyncadd [#allocation4], %s414
      %s417 = sshll.u32 [#allocation7], 4
      %s418 = int_to_ptr.vmem [resolvable:$true] %s417
      %420 = dma.vmem_to_hbm [thread:$0]  %s418, 64, %s7, [#allocation4]
    $region41: #{tpu_custom_call.1} parent=1 // pred_fallthru
      _
    // Predicated region
    $region42: #{tpu_custom_call.1} parent=1 // pred_check
      _
    $region43: #{tpu_custom_call.1} parent=1 // pred_check_branch
      %422 = sbr.rel (0) target = $region45
    $region44: #{tpu_custom_call.1} parent=1 // pred_region
      %423 = dma.done [#allocation4], 64
    $region45: #{tpu_custom_call.1} parent=1 // pred_fallthru
      _
    %424 = vsyncpa [#allocation3], 1
    %425 = vsyncpa [#allocation6], 1
    %426 = vsyncpa [#allocation4], 1

</llo_original>
